<compile_context>
chip_gen: v6e
topology: v6e:2x2x1
jax: 0.10.0
libtpu: 0.0.40
codegen_flags: <defaults>
</compile_context>

<pallas_src>
import jax
import jax.numpy as jnp
from jax.experimental import pallas as pl
from jax.experimental.pallas import tpu as pltpu

# ---- small, module-consistent dims (scaled down from CFG) ----------------
FEATURE_DIM = 64      # CFG.feature_dim (scaled)
HIDDEN_DIM = 128      # CFG.hidden_dim (scaled)
NUM_LAYERS = 4        # CFG.num_gcn_layers
NUM_NODES = 16
NUM_EDGES = 48
LN_EPS = 1e-5


# --------------------------------------------------------------------------
# Pallas kernel: one gene per grid step (grid axis = gene population, parallel)
# --------------------------------------------------------------------------
def _gene_kernel(sign_ref, x_ref, a_ref, w_ref, ln_ref, o_ref):
    """Fused 4x(GCNConv -> LayerNorm -> ReLU) -> (sign * node-mean)."""
    g = pl.program_id(0)

    a16 = a_ref[...].astype(jnp.bfloat16)            # [N, N]  (bf16 for MXU)
    h = x_ref[...]                                   # [N, H]  f32 (feature-padded)

    for l in range(NUM_LAYERS):
        # GCNConv: A_norm @ (h @ W_l) + b_l  — bf16 MXU inputs, f32 accumulate
        w16 = w_ref[0, l].astype(jnp.bfloat16)       # [H, H]
        hw = jnp.dot(h.astype(jnp.bfloat16), w16,
                     preferred_element_type=jnp.float32)          # [N, H]
        h = jnp.dot(a16, hw.astype(jnp.bfloat16),
                    preferred_element_type=jnp.float32)           # [N, H]

        lnl = ln_ref[0, l]                           # [3, H] : bias, gamma, beta
        h = h + lnl[0:1, :]                          # GCN bias

        # LayerNorm over last dim — single-pass variance: E[h^2] - mu^2
        mu = jnp.mean(h, axis=-1, keepdims=True)
        var = jnp.maximum(jnp.mean(h * h, axis=-1, keepdims=True) - mu * mu, 0.0)
        h = (h - mu) * jax.lax.rsqrt(var + LN_EPS)
        h = h * lnl[1:2, :] + lnl[2:3, :]

        h = jnp.maximum(h, 0.0)                      # ReLU

    # fold is_inverted sign and the 1/N of the node-mean into one scalar scale
    scale = sign_ref[g].astype(jnp.float32) * (1.0 / NUM_NODES)
    o_ref[0] = jnp.sum(h, axis=0, keepdims=True) * scale          # [1, H]


# --------------------------------------------------------------------------
# Glue (all jitted into one program with the pallas_call)
# --------------------------------------------------------------------------
def _build_a_norm(edge_index, n):
    """Dense D^-1/2 (A + I) D^-1/2, A[i,j] = #edges j->i (PyG gcn_norm)."""
    src = edge_index[0]
    dst = edge_index[1]
    src_oh = jax.nn.one_hot(src, n, dtype=jnp.float32)            # [E, N]
    dst_oh = jax.nn.one_hot(dst, n, dtype=jnp.float32)            # [E, N]
    a_hat = jnp.dot(dst_oh.T, src_oh) + jnp.eye(n, dtype=jnp.float32)
    deg = jnp.sum(a_hat, axis=1)
    dinv = jnp.where(deg > 0, jax.lax.rsqrt(deg), 0.0)
    return dinv[:, None] * a_hat * dinv[None, :]                  # [N, N]


@jax.jit
def transposable_genes_forward_batched(x, edge_index, weights, ln, signs):
    """Batched over a gene population.

    x: [N, F] f32, edge_index: [2, E] int32 (shared graph)
    weights: [G, L, H, H] f32 (W0 zero-padded along its input dim)
    ln:      [G, L, 3, H] f32 (bias, gamma, beta stacked)
    signs:   [G] int32 (+1, or -1 if gene.is_inverted)
    returns: [G, 1, H] f32
    """
    n = x.shape[0]
    num_genes = weights.shape[0]

    a_norm = _build_a_norm(edge_index, n)
    x_pad = jnp.pad(x, ((0, 0), (0, HIDDEN_DIM - x.shape[1])))    # [N, H]

    grid_spec = pltpu.PrefetchScalarGridSpec(
        num_scalar_prefetch=1,            # signs -> SMEM
        grid=(num_genes,),
        in_specs=[
            pl.BlockSpec((NUM_NODES, HIDDEN_DIM), lambda g, s: (0, 0)),
            pl.BlockSpec((NUM_NODES, NUM_NODES), lambda g, s: (0, 0)),
            pl.BlockSpec((1, NUM_LAYERS, HIDDEN_DIM, HIDDEN_DIM),
                         lambda g, s: (g, 0, 0, 0)),
            pl.BlockSpec((1, NUM_LAYERS, 3, HIDDEN_DIM),
                         lambda g, s: (g, 0, 0, 0)),
        ],
        out_specs=pl.BlockSpec((1, 1, HIDDEN_DIM), lambda g, s: (g, 0, 0)),
    )

    return pl.pallas_call(
        _gene_kernel,
        out_shape=jax.ShapeDtypeStruct((num_genes, 1, HIDDEN_DIM), jnp.float32),
        grid_spec=grid_spec,
        compiler_params=pltpu.CompilerParams(
            dimension_semantics=("parallel",)),
    )(signs, x_pad, a_norm, weights, ln)


def transposable_gene_forward(x, edge_index, params, *, is_inverted=False):
    """Single-gene forward (matches the module's signature). Returns [1, H]."""
    weights, ln = pack_gene_params(params)
    sign = jnp.full((1,), -1 if is_inverted else 1, dtype=jnp.int32)
    out = transposable_genes_forward_batched(
        x, edge_index, weights[None], ln[None], sign)
    return out[0]


# --------------------------------------------------------------------------
# Parameter helpers
# --------------------------------------------------------------------------
def init_gene_params(key):
    """Synthetic parameters matching TransposableGene.__init__ defaults."""
    k0, k1 = jax.random.split(key)
    w0 = (jax.random.normal(k0, (FEATURE_DIM, HIDDEN_DIM), jnp.float32)
          * (FEATURE_DIM ** -0.5))
    w_rest = (jax.random.normal(k1, (NUM_LAYERS - 1, HIDDEN_DIM, HIDDEN_DIM),
                                jnp.float32) * (HIDDEN_DIM ** -0.5))
    bias = jnp.zeros((NUM_LAYERS, HIDDEN_DIM), jnp.float32)   # GCNConv bias = 0
    gamma = jnp.ones((NUM_LAYERS, HIDDEN_DIM), jnp.float32)   # fresh LayerNorm
    beta = jnp.zeros((NUM_LAYERS, HIDDEN_DIM), jnp.float32)
    return (w0, w_rest, bias, gamma, beta)


def pack_gene_params(params):
    """Pack per-gene params into the two kernel operands."""
    w0, w_rest, bias, gamma, beta = params
    w0_pad = jnp.pad(w0, ((0, HIDDEN_DIM - FEATURE_DIM), (0, 0)))     # [H, H]
    weights = jnp.concatenate([w0_pad[None], w_rest], axis=0)         # [L, H, H]
    ln = jnp.stack([bias, gamma, beta], axis=1)                       # [L, 3, H]
    return weights, ln


# --------------------------------------------------------------------------
# Plain-JAX f32 reference (for validation)
# --------------------------------------------------------------------------
def gene_forward_reference(x, edge_index, params, is_inverted):
    w0, w_rest, bias, gamma, beta = params
    a_norm = _build_a_norm(edge_index, x.shape[0])
    h = x
    for l in range(NUM_LAYERS):
        w = w0 if l == 0 else w_rest[l - 1]
        h = a_norm @ (h @ w) + bias[l]
        mu = jnp.mean(h, axis=-1, keepdims=True)
        var = jnp.mean((h - mu) ** 2, axis=-1, keepdims=True)
        h = (h - mu) / jnp.sqrt(var + LN_EPS)
        h = h * gamma[l] + beta[l]
        h = jnp.maximum(h, 0.0)
    if is_inverted:
        h = -h
    return jnp.mean(h, axis=0, keepdims=True)


# --------------------------------------------------------------------------
if __name__ == "__main__":
    key = jax.random.PRNGKey(0)
    kx, ke, kp = jax.random.split(key, 3)

    x = jax.random.normal(kx, (NUM_NODES, FEATURE_DIM), jnp.float32)
    edge_index = jax.random.randint(ke, (2, NUM_EDGES), 0, NUM_NODES,
                                    dtype=jnp.int32)

    # Small gene population: exercises the parallel gene grid axis.
    pop = 4
    gene_keys = jax.random.split(kp, pop)
    gene_params = [init_gene_params(k) for k in gene_keys]
    inverted = [False, True, False, True]

    packed = [pack_gene_params(p) for p in gene_params]
    weights = jnp.stack([pw for pw, _ in packed])        # [G, L, H, H]
    lns = jnp.stack([pn for _, pn in packed])            # [G, L, 3, H]
    signs = jnp.array([-1 if inv else 1 for inv in inverted], jnp.int32)

    out_batched = jax.block_until_ready(
        transposable_genes_forward_batched(x, edge_index, weights, lns, signs))
    assert out_batched.shape == (pop, 1, HIDDEN_DIM)
    assert bool(jnp.all(jnp.isfinite(out_batched)))

    # Validate against the f32 reference (bf16 MXU inputs -> small drift).
    for i in range(pop):
        ref = gene_forward_reference(x, edge_index, gene_params[i], inverted[i])
        err = float(jnp.max(jnp.abs(out_batched[i] - ref)))
        assert err < 0.1, f"gene {i}: max abs err {err}"

    # Single-gene path (matches TransposableGene.forward, batch=None).
    out_single = jax.block_until_ready(
        transposable_gene_forward(x, edge_index, gene_params[0],
                                  is_inverted=False))
    assert out_single.shape == (1, HIDDEN_DIM)
    assert bool(jnp.all(jnp.isfinite(out_single)))

    print("KERNEL_OK")
</pallas_src>

<mosaic_0001>
module attributes {stable_mosaic.version = 11 : i64} {
  func.func @_gene_kernel(%arg0: i32, %arg1: memref<4xi32, #tpu.memory_space<smem>>, %arg2: memref<16x128xf32, #tpu.memory_space<vmem>>, %arg3: memref<16x16xf32, #tpu.memory_space<vmem>>, %arg4: memref<1x4x128x128xf32, #tpu.memory_space<vmem>>, %arg5: memref<1x4x3x128xf32, #tpu.memory_space<vmem>>, %arg6: memref<1x1x128xf32, #tpu.memory_space<vmem>>) attributes {dimension_semantics = [#tpu.dimension_semantics<parallel>], iteration_bounds = array<i64: 4>, scalar_prefetch = 1 : i64, scratch_operands = 0 : i64, tpu.core_type = #tpu.core_type<tc>, window_params = [{pipeline_mode = #tpu.pipeline_mode<synchronous>, transform_indices = @transform_0, window_bounds = array<i64: 16, 128>}, {pipeline_mode = #tpu.pipeline_mode<synchronous>, transform_indices = @transform_1, window_bounds = array<i64: 16, 16>}, {transform_indices = @transform_2, window_bounds = array<i64: 1, 4, 128, 128>}, {transform_indices = @transform_3, window_bounds = array<i64: 1, 4, 3, 128>}, {transform_indices = @transform_4, window_bounds = array<i64: 1, 1, 128>}]} {
    %c0 = arith.constant 0 : index
    %c0_0 = arith.constant 0 : index
    %0 = vector.load %arg3[%c0, %c0_0] : memref<16x16xf32, #tpu.memory_space<vmem>>, vector<16x16xf32>
    %1 = arith.truncf %0 : vector<16x16xf32> to vector<16x16xbf16>
    %c0_1 = arith.constant 0 : index
    %c0_2 = arith.constant 0 : index
    %2 = vector.load %arg2[%c0_1, %c0_2] : memref<16x128xf32, #tpu.memory_space<vmem>>, vector<16x128xf32>
    %c0_3 = arith.constant 0 : index
    %c0_4 = arith.constant 0 : index
    %c0_5 = arith.constant 0 : index
    %c0_6 = arith.constant 0 : index
    %3 = vector.load %arg4[%c0_3, %c0_4, %c0_5, %c0_6] : memref<1x4x128x128xf32, #tpu.memory_space<vmem>>, vector<1x1x128x128xf32>
    %4 = vector.shape_cast %3 : vector<1x1x128x128xf32> to vector<128x128xf32>
    %5 = arith.truncf %4 : vector<128x128xf32> to vector<128x128xbf16>
    %6 = arith.truncf %2 : vector<16x128xf32> to vector<16x128xbf16>
    %cst = arith.constant dense<0.000000e+00> : vector<16x128xf32>
    %7 = tpu.matmul %6, %5, %cst {dimension_numbers = #tpu.dot_dimension_numbers<[1], [0], [0], [1], [0, 0, 1, 1], [], []>} : vector<16x128xbf16>, vector<128x128xbf16>, vector<16x128xf32> -> vector<16x128xf32>
    %8 = arith.truncf %7 : vector<16x128xf32> to vector<16x128xbf16>
    %cst_7 = arith.constant dense<0.000000e+00> : vector<16x128xf32>
    %9 = tpu.matmul %1, %8, %cst_7 {dimension_numbers = #tpu.dot_dimension_numbers<[1], [0], [0], [1], [0, 0, 1, 1], [], []>} : vector<16x16xbf16>, vector<16x128xbf16>, vector<16x128xf32> -> vector<16x128xf32>
    %c0_8 = arith.constant 0 : index
    %c0_9 = arith.constant 0 : index
    %c0_10 = arith.constant 0 : index
    %c0_11 = arith.constant 0 : index
    %10 = vector.load %arg5[%c0_8, %c0_9, %c0_10, %c0_11] : memref<1x4x3x128xf32, #tpu.memory_space<vmem>>, vector<1x1x3x128xf32>
    %11 = vector.shape_cast %10 : vector<1x1x3x128xf32> to vector<3x128xf32>
    %12 = vector.extract_strided_slice %11 {offsets = [0, 0], sizes = [1, 128], strides = [1, 1]} : vector<3x128xf32> to vector<1x128xf32>
    %13 = vector.broadcast %12 : vector<1x128xf32> to vector<16x128xf32>
    %14 = arith.addf %9, %13 : vector<16x128xf32>
    %cst_12 = arith.constant dense<0.000000e+00> : vector<16xf32>
    %15 = vector.multi_reduction <add>, %14, %cst_12 [1] : vector<16x128xf32> to vector<16xf32>
    %16 = vector.shape_cast %15 : vector<16xf32> to vector<16x1xf32>
    %cst_13 = arith.constant 1.280000e+02 : f32
    %17 = vector.broadcast %cst_13 : f32 to vector<16x1xf32>
    %18 = arith.divf %16, %17 : vector<16x1xf32>
    %19 = arith.mulf %14, %14 : vector<16x128xf32>
    %cst_14 = arith.constant dense<0.000000e+00> : vector<16xf32>
    %20 = vector.multi_reduction <add>, %19, %cst_14 [1] : vector<16x128xf32> to vector<16xf32>
    %21 = vector.shape_cast %20 : vector<16xf32> to vector<16x1xf32>
    %cst_15 = arith.constant 1.280000e+02 : f32
    %22 = vector.broadcast %cst_15 : f32 to vector<16x1xf32>
    %23 = arith.divf %21, %22 : vector<16x1xf32>
    %24 = arith.mulf %18, %18 : vector<16x1xf32>
    %25 = arith.subf %23, %24 : vector<16x1xf32>
    %cst_16 = arith.constant 0.000000e+00 : f32
    %26 = vector.broadcast %cst_16 : f32 to vector<16x1xf32>
    %27 = arith.maximumf %25, %26 : vector<16x1xf32>
    %28 = vector.broadcast %18 : vector<16x1xf32> to vector<16x128xf32>
    %29 = arith.subf %14, %28 : vector<16x128xf32>
    %cst_17 = arith.constant 9.99999974E-6 : f32
    %30 = vector.broadcast %cst_17 : f32 to vector<16x1xf32>
    %31 = arith.addf %27, %30 : vector<16x1xf32>
    %32 = math.rsqrt %31 : vector<16x1xf32>
    %33 = vector.broadcast %32 : vector<16x1xf32> to vector<16x128xf32>
    %34 = arith.mulf %29, %33 : vector<16x128xf32>
    %35 = vector.extract_strided_slice %11 {offsets = [1, 0], sizes = [1, 128], strides = [1, 1]} : vector<3x128xf32> to vector<1x128xf32>
    %36 = vector.broadcast %35 : vector<1x128xf32> to vector<16x128xf32>
    %37 = arith.mulf %34, %36 : vector<16x128xf32>
    %38 = vector.extract_strided_slice %11 {offsets = [2, 0], sizes = [1, 128], strides = [1, 1]} : vector<3x128xf32> to vector<1x128xf32>
    %39 = vector.broadcast %38 : vector<1x128xf32> to vector<16x128xf32>
    %40 = arith.addf %37, %39 : vector<16x128xf32>
    %cst_18 = arith.constant 0.000000e+00 : f32
    %41 = vector.broadcast %cst_18 : f32 to vector<16x128xf32>
    %42 = arith.maximumf %40, %41 : vector<16x128xf32>
    %c0_19 = arith.constant 0 : index
    %c1 = arith.constant 1 : index
    %c0_20 = arith.constant 0 : index
    %c0_21 = arith.constant 0 : index
    %43 = vector.load %arg4[%c0_19, %c1, %c0_20, %c0_21] : memref<1x4x128x128xf32, #tpu.memory_space<vmem>>, vector<1x1x128x128xf32>
    %44 = vector.shape_cast %43 : vector<1x1x128x128xf32> to vector<128x128xf32>
    %45 = arith.truncf %44 : vector<128x128xf32> to vector<128x128xbf16>
    %46 = arith.truncf %42 : vector<16x128xf32> to vector<16x128xbf16>
    %cst_22 = arith.constant dense<0.000000e+00> : vector<16x128xf32>
    %47 = tpu.matmul %46, %45, %cst_22 {dimension_numbers = #tpu.dot_dimension_numbers<[1], [0], [0], [1], [0, 0, 1, 1], [], []>} : vector<16x128xbf16>, vector<128x128xbf16>, vector<16x128xf32> -> vector<16x128xf32>
    %48 = arith.truncf %47 : vector<16x128xf32> to vector<16x128xbf16>
    %cst_23 = arith.constant dense<0.000000e+00> : vector<16x128xf32>
    %49 = tpu.matmul %1, %48, %cst_23 {dimension_numbers = #tpu.dot_dimension_numbers<[1], [0], [0], [1], [0, 0, 1, 1], [], []>} : vector<16x16xbf16>, vector<16x128xbf16>, vector<16x128xf32> -> vector<16x128xf32>
    %c0_24 = arith.constant 0 : index
    %c1_25 = arith.constant 1 : index
    %c0_26 = arith.constant 0 : index
    %c0_27 = arith.constant 0 : index
    %50 = vector.load %arg5[%c0_24, %c1_25, %c0_26, %c0_27] : memref<1x4x3x128xf32, #tpu.memory_space<vmem>>, vector<1x1x3x128xf32>
    %51 = vector.shape_cast %50 : vector<1x1x3x128xf32> to vector<3x128xf32>
    %52 = vector.extract_strided_slice %51 {offsets = [0, 0], sizes = [1, 128], strides = [1, 1]} : vector<3x128xf32> to vector<1x128xf32>
    %53 = vector.broadcast %52 : vector<1x128xf32> to vector<16x128xf32>
    %54 = arith.addf %49, %53 : vector<16x128xf32>
    %cst_28 = arith.constant dense<0.000000e+00> : vector<16xf32>
    %55 = vector.multi_reduction <add>, %54, %cst_28 [1] : vector<16x128xf32> to vector<16xf32>
    %56 = vector.shape_cast %55 : vector<16xf32> to vector<16x1xf32>
    %cst_29 = arith.constant 1.280000e+02 : f32
    %57 = vector.broadcast %cst_29 : f32 to vector<16x1xf32>
    %58 = arith.divf %56, %57 : vector<16x1xf32>
    %59 = arith.mulf %54, %54 : vector<16x128xf32>
    %cst_30 = arith.constant dense<0.000000e+00> : vector<16xf32>
    %60 = vector.multi_reduction <add>, %59, %cst_30 [1] : vector<16x128xf32> to vector<16xf32>
    %61 = vector.shape_cast %60 : vector<16xf32> to vector<16x1xf32>
    %cst_31 = arith.constant 1.280000e+02 : f32
    %62 = vector.broadcast %cst_31 : f32 to vector<16x1xf32>
    %63 = arith.divf %61, %62 : vector<16x1xf32>
    %64 = arith.mulf %58, %58 : vector<16x1xf32>
    %65 = arith.subf %63, %64 : vector<16x1xf32>
    %cst_32 = arith.constant 0.000000e+00 : f32
    %66 = vector.broadcast %cst_32 : f32 to vector<16x1xf32>
    %67 = arith.maximumf %65, %66 : vector<16x1xf32>
    %68 = vector.broadcast %58 : vector<16x1xf32> to vector<16x128xf32>
    %69 = arith.subf %54, %68 : vector<16x128xf32>
    %cst_33 = arith.constant 9.99999974E-6 : f32
    %70 = vector.broadcast %cst_33 : f32 to vector<16x1xf32>
    %71 = arith.addf %67, %70 : vector<16x1xf32>
    %72 = math.rsqrt %71 : vector<16x1xf32>
    %73 = vector.broadcast %72 : vector<16x1xf32> to vector<16x128xf32>
    %74 = arith.mulf %69, %73 : vector<16x128xf32>
    %75 = vector.extract_strided_slice %51 {offsets = [1, 0], sizes = [1, 128], strides = [1, 1]} : vector<3x128xf32> to vector<1x128xf32>
    %76 = vector.broadcast %75 : vector<1x128xf32> to vector<16x128xf32>
    %77 = arith.mulf %74, %76 : vector<16x128xf32>
    %78 = vector.extract_strided_slice %51 {offsets = [2, 0], sizes = [1, 128], strides = [1, 1]} : vector<3x128xf32> to vector<1x128xf32>
    %79 = vector.broadcast %78 : vector<1x128xf32> to vector<16x128xf32>
    %80 = arith.addf %77, %79 : vector<16x128xf32>
    %cst_34 = arith.constant 0.000000e+00 : f32
    %81 = vector.broadcast %cst_34 : f32 to vector<16x128xf32>
    %82 = arith.maximumf %80, %81 : vector<16x128xf32>
    %c0_35 = arith.constant 0 : index
    %c2 = arith.constant 2 : index
    %c0_36 = arith.constant 0 : index
    %c0_37 = arith.constant 0 : index
    %83 = vector.load %arg4[%c0_35, %c2, %c0_36, %c0_37] : memref<1x4x128x128xf32, #tpu.memory_space<vmem>>, vector<1x1x128x128xf32>
    %84 = vector.shape_cast %83 : vector<1x1x128x128xf32> to vector<128x128xf32>
    %85 = arith.truncf %84 : vector<128x128xf32> to vector<128x128xbf16>
    %86 = arith.truncf %82 : vector<16x128xf32> to vector<16x128xbf16>
    %cst_38 = arith.constant dense<0.000000e+00> : vector<16x128xf32>
    %87 = tpu.matmul %86, %85, %cst_38 {dimension_numbers = #tpu.dot_dimension_numbers<[1], [0], [0], [1], [0, 0, 1, 1], [], []>} : vector<16x128xbf16>, vector<128x128xbf16>, vector<16x128xf32> -> vector<16x128xf32>
    %88 = arith.truncf %87 : vector<16x128xf32> to vector<16x128xbf16>
    %cst_39 = arith.constant dense<0.000000e+00> : vector<16x128xf32>
    %89 = tpu.matmul %1, %88, %cst_39 {dimension_numbers = #tpu.dot_dimension_numbers<[1], [0], [0], [1], [0, 0, 1, 1], [], []>} : vector<16x16xbf16>, vector<16x128xbf16>, vector<16x128xf32> -> vector<16x128xf32>
    %c0_40 = arith.constant 0 : index
    %c2_41 = arith.constant 2 : index
    %c0_42 = arith.constant 0 : index
    %c0_43 = arith.constant 0 : index
    %90 = vector.load %arg5[%c0_40, %c2_41, %c0_42, %c0_43] : memref<1x4x3x128xf32, #tpu.memory_space<vmem>>, vector<1x1x3x128xf32>
    %91 = vector.shape_cast %90 : vector<1x1x3x128xf32> to vector<3x128xf32>
    %92 = vector.extract_strided_slice %91 {offsets = [0, 0], sizes = [1, 128], strides = [1, 1]} : vector<3x128xf32> to vector<1x128xf32>
    %93 = vector.broadcast %92 : vector<1x128xf32> to vector<16x128xf32>
    %94 = arith.addf %89, %93 : vector<16x128xf32>
    %cst_44 = arith.constant dense<0.000000e+00> : vector<16xf32>
    %95 = vector.multi_reduction <add>, %94, %cst_44 [1] : vector<16x128xf32> to vector<16xf32>
    %96 = vector.shape_cast %95 : vector<16xf32> to vector<16x1xf32>
    %cst_45 = arith.constant 1.280000e+02 : f32
    %97 = vector.broadcast %cst_45 : f32 to vector<16x1xf32>
    %98 = arith.divf %96, %97 : vector<16x1xf32>
    %99 = arith.mulf %94, %94 : vector<16x128xf32>
    %cst_46 = arith.constant dense<0.000000e+00> : vector<16xf32>
    %100 = vector.multi_reduction <add>, %99, %cst_46 [1] : vector<16x128xf32> to vector<16xf32>
    %101 = vector.shape_cast %100 : vector<16xf32> to vector<16x1xf32>
    %cst_47 = arith.constant 1.280000e+02 : f32
    %102 = vector.broadcast %cst_47 : f32 to vector<16x1xf32>
    %103 = arith.divf %101, %102 : vector<16x1xf32>
    %104 = arith.mulf %98, %98 : vector<16x1xf32>
    %105 = arith.subf %103, %104 : vector<16x1xf32>
    %cst_48 = arith.constant 0.000000e+00 : f32
    %106 = vector.broadcast %cst_48 : f32 to vector<16x1xf32>
    %107 = arith.maximumf %105, %106 : vector<16x1xf32>
    %108 = vector.broadcast %98 : vector<16x1xf32> to vector<16x128xf32>
    %109 = arith.subf %94, %108 : vector<16x128xf32>
    %cst_49 = arith.constant 9.99999974E-6 : f32
    %110 = vector.broadcast %cst_49 : f32 to vector<16x1xf32>
    %111 = arith.addf %107, %110 : vector<16x1xf32>
    %112 = math.rsqrt %111 : vector<16x1xf32>
    %113 = vector.broadcast %112 : vector<16x1xf32> to vector<16x128xf32>
    %114 = arith.mulf %109, %113 : vector<16x128xf32>
    %115 = vector.extract_strided_slice %91 {offsets = [1, 0], sizes = [1, 128], strides = [1, 1]} : vector<3x128xf32> to vector<1x128xf32>
    %116 = vector.broadcast %115 : vector<1x128xf32> to vector<16x128xf32>
    %117 = arith.mulf %114, %116 : vector<16x128xf32>
    %118 = vector.extract_strided_slice %91 {offsets = [2, 0], sizes = [1, 128], strides = [1, 1]} : vector<3x128xf32> to vector<1x128xf32>
    %119 = vector.broadcast %118 : vector<1x128xf32> to vector<16x128xf32>
    %120 = arith.addf %117, %119 : vector<16x128xf32>
    %cst_50 = arith.constant 0.000000e+00 : f32
    %121 = vector.broadcast %cst_50 : f32 to vector<16x128xf32>
    %122 = arith.maximumf %120, %121 : vector<16x128xf32>
    %c0_51 = arith.constant 0 : index
    %c3 = arith.constant 3 : index
    %c0_52 = arith.constant 0 : index
    %c0_53 = arith.constant 0 : index
    %123 = vector.load %arg4[%c0_51, %c3, %c0_52, %c0_53] : memref<1x4x128x128xf32, #tpu.memory_space<vmem>>, vector<1x1x128x128xf32>
    %124 = vector.shape_cast %123 : vector<1x1x128x128xf32> to vector<128x128xf32>
    %125 = arith.truncf %124 : vector<128x128xf32> to vector<128x128xbf16>
    %126 = arith.truncf %122 : vector<16x128xf32> to vector<16x128xbf16>
    %cst_54 = arith.constant dense<0.000000e+00> : vector<16x128xf32>
    %127 = tpu.matmul %126, %125, %cst_54 {dimension_numbers = #tpu.dot_dimension_numbers<[1], [0], [0], [1], [0, 0, 1, 1], [], []>} : vector<16x128xbf16>, vector<128x128xbf16>, vector<16x128xf32> -> vector<16x128xf32>
    %128 = arith.truncf %127 : vector<16x128xf32> to vector<16x128xbf16>
    %cst_55 = arith.constant dense<0.000000e+00> : vector<16x128xf32>
    %129 = tpu.matmul %1, %128, %cst_55 {dimension_numbers = #tpu.dot_dimension_numbers<[1], [0], [0], [1], [0, 0, 1, 1], [], []>} : vector<16x16xbf16>, vector<16x128xbf16>, vector<16x128xf32> -> vector<16x128xf32>
    %c0_56 = arith.constant 0 : index
    %c3_57 = arith.constant 3 : index
    %c0_58 = arith.constant 0 : index
    %c0_59 = arith.constant 0 : index
    %130 = vector.load %arg5[%c0_56, %c3_57, %c0_58, %c0_59] : memref<1x4x3x128xf32, #tpu.memory_space<vmem>>, vector<1x1x3x128xf32>
    %131 = vector.shape_cast %130 : vector<1x1x3x128xf32> to vector<3x128xf32>
    %132 = vector.extract_strided_slice %131 {offsets = [0, 0], sizes = [1, 128], strides = [1, 1]} : vector<3x128xf32> to vector<1x128xf32>
    %133 = vector.broadcast %132 : vector<1x128xf32> to vector<16x128xf32>
    %134 = arith.addf %129, %133 : vector<16x128xf32>
    %cst_60 = arith.constant dense<0.000000e+00> : vector<16xf32>
    %135 = vector.multi_reduction <add>, %134, %cst_60 [1] : vector<16x128xf32> to vector<16xf32>
    %136 = vector.shape_cast %135 : vector<16xf32> to vector<16x1xf32>
    %cst_61 = arith.constant 1.280000e+02 : f32
    %137 = vector.broadcast %cst_61 : f32 to vector<16x1xf32>
    %138 = arith.divf %136, %137 : vector<16x1xf32>
    %139 = arith.mulf %134, %134 : vector<16x128xf32>
    %cst_62 = arith.constant dense<0.000000e+00> : vector<16xf32>
    %140 = vector.multi_reduction <add>, %139, %cst_62 [1] : vector<16x128xf32> to vector<16xf32>
    %141 = vector.shape_cast %140 : vector<16xf32> to vector<16x1xf32>
    %cst_63 = arith.constant 1.280000e+02 : f32
    %142 = vector.broadcast %cst_63 : f32 to vector<16x1xf32>
    %143 = arith.divf %141, %142 : vector<16x1xf32>
    %144 = arith.mulf %138, %138 : vector<16x1xf32>
    %145 = arith.subf %143, %144 : vector<16x1xf32>
    %cst_64 = arith.constant 0.000000e+00 : f32
    %146 = vector.broadcast %cst_64 : f32 to vector<16x1xf32>
    %147 = arith.maximumf %145, %146 : vector<16x1xf32>
    %148 = vector.broadcast %138 : vector<16x1xf32> to vector<16x128xf32>
    %149 = arith.subf %134, %148 : vector<16x128xf32>
    %cst_65 = arith.constant 9.99999974E-6 : f32
    %150 = vector.broadcast %cst_65 : f32 to vector<16x1xf32>
    %151 = arith.addf %147, %150 : vector<16x1xf32>
    %152 = math.rsqrt %151 : vector<16x1xf32>
    %153 = vector.broadcast %152 : vector<16x1xf32> to vector<16x128xf32>
    %154 = arith.mulf %149, %153 : vector<16x128xf32>
    %155 = vector.extract_strided_slice %131 {offsets = [1, 0], sizes = [1, 128], strides = [1, 1]} : vector<3x128xf32> to vector<1x128xf32>
    %156 = vector.broadcast %155 : vector<1x128xf32> to vector<16x128xf32>
    %157 = arith.mulf %154, %156 : vector<16x128xf32>
    %158 = vector.extract_strided_slice %131 {offsets = [2, 0], sizes = [1, 128], strides = [1, 1]} : vector<3x128xf32> to vector<1x128xf32>
    %159 = vector.broadcast %158 : vector<1x128xf32> to vector<16x128xf32>
    %160 = arith.addf %157, %159 : vector<16x128xf32>
    %cst_66 = arith.constant 0.000000e+00 : f32
    %161 = vector.broadcast %cst_66 : f32 to vector<16x128xf32>
    %162 = arith.maximumf %160, %161 : vector<16x128xf32>
    %163 = arith.index_cast %arg0 : i32 to index
    %164 = memref.load %arg1[%163] : memref<4xi32, #tpu.memory_space<smem>>
    %165 = arith.sitofp %164 : i32 to f32
    %cst_67 = arith.constant 6.250000e-02 : f32
    %166 = arith.mulf %165, %cst_67 : f32
    %cst_68 = arith.constant dense<0.000000e+00> : vector<128xf32>
    %167 = vector.multi_reduction <add>, %162, %cst_68 [0] : vector<16x128xf32> to vector<128xf32>
    %168 = vector.shape_cast %167 : vector<128xf32> to vector<1x128xf32>
    %169 = vector.broadcast %166 : f32 to vector<1x128xf32>
    %170 = arith.mulf %168, %169 : vector<1x128xf32>
    %c0_69 = arith.constant 0 : index
    %c0_70 = arith.constant 0 : index
    %c0_71 = arith.constant 0 : index
    %171 = vector.load %arg6[%c0_69, %c0_70, %c0_71] : memref<1x1x128xf32, #tpu.memory_space<vmem>>, vector<1x1x128xf32>
    %172 = vector.shape_cast %171 : vector<1x1x128xf32> to vector<1x128xf32>
    %173 = vector.shape_cast %170 : vector<1x128xf32> to vector<1x1x128xf32>
    tpu.vector_store %arg6[%c0_69, %c0_70, %c0_71], %173 {strides = array<i32>} : memref<1x1x128xf32, #tpu.memory_space<vmem>>, vector<1x1x128xf32>,
    return
  }
  func.func @transform_0(%arg0: i32, %arg1: memref<4xi32, #tpu.memory_space<smem>>) -> (i32, i32) {
    %c0_i32 = arith.constant 0 : i32
    %c0_i32_0 = arith.constant 0 : i32
    %c0_i32_1 = arith.constant 0 : i32
    return %c0_i32, %c0_i32_0 : i32, i32
  }
  func.func @transform_1(%arg0: i32, %arg1: memref<4xi32, #tpu.memory_space<smem>>) -> (i32, i32) {
    %c0_i32 = arith.constant 0 : i32
    %c0_i32_0 = arith.constant 0 : i32
    %c0_i32_1 = arith.constant 0 : i32
    return %c0_i32, %c0_i32_0 : i32, i32
  }
  func.func @transform_2(%arg0: i32, %arg1: memref<4xi32, #tpu.memory_space<smem>>) -> (i32, i32, i32, i32) {
    %c0_i32 = arith.constant 0 : i32
    %c0_i32_0 = arith.constant 0 : i32
    %c0_i32_1 = arith.constant 0 : i32
    %c0_i32_2 = arith.constant 0 : i32
    return %arg0, %c0_i32, %c0_i32_0, %c0_i32_1 : i32, i32, i32, i32
  }
  func.func @transform_3(%arg0: i32, %arg1: memref<4xi32, #tpu.memory_space<smem>>) -> (i32, i32, i32, i32) {
    %c0_i32 = arith.constant 0 : i32
    %c0_i32_0 = arith.constant 0 : i32
    %c0_i32_1 = arith.constant 0 : i32
    %c0_i32_2 = arith.constant 0 : i32
    return %arg0, %c0_i32, %c0_i32_0, %c0_i32_1 : i32, i32, i32, i32
  }
  func.func @transform_4(%arg0: i32, %arg1: memref<4xi32, #tpu.memory_space<smem>>) -> (i32, i32, i32) {
    %c0_i32 = arith.constant 0 : i32
    %c0_i32_0 = arith.constant 0 : i32
    %c0_i32_1 = arith.constant 0 : i32
    return %arg0, %c0_i32, %c0_i32_0 : i32, i32, i32
  }
}

</mosaic_0001>

<llo_original>
// kernel: transposable_genes_forward_batched.1
$region0: #{transposable_genes_forward_batched.1}
  #allocation0 [shape = 'u32[]', space=smem, size = 0x4, offset = 0x4, fixed_abs, tag = 'smem constant byte address 0x4 - core index']
  #allocation1 [shape = 'u32[144,128]{1,0:T(1,128)}', space=vmem, size = 0x12000, scoped, tag = 'internal scratch']
  #allocation2 [shape = 's32[1]{0}', space=sflag, size = 0x4, scoped, tag = 'scoped memory for transposable_genes_forward_batched.1']
  #allocation3 [shape = 'u8[512]{0}', space=smem, size = 0x200, scoped, tag = 'prefetched SMEM operand 0']
  %s0 = inlined_call_operand.vmem [shape: s32[4], index: 0, kind: input, shape index: {}]
  %s1 = inlined_call_operand.vmem [shape: f32[16,128], index: 1, kind: input, shape index: {}]
  %s2 = inlined_call_operand.vmem [shape: f32[16,16], index: 2, kind: input, shape index: {}]
  %s3 = inlined_call_operand.hbm [shape: f32[4,4,128,128], index: 3, kind: input, shape index: {}]
  %s4 = inlined_call_operand.vmem [shape: f32[4,4,3,128], index: 4, kind: input, shape index: {}]
  %s5 = inlined_call_operand.hbm [shape: f32[4,1,128], index: 5, kind: output, shape index: {}]
  %s6 = sld [smem:[#allocation0]]
  $region53: #{transposable_genes_forward_batched.1} parent=0
    _
  %s8 = ssub.s32 1, %s6
  %s9 = scalar_select 0, %s8, %s6
  %s10 = sshll.u32 %s0, 4
  %s11 = int_to_ptr.vmem [resolvable:$true] %s10
  %13 = dma.vmem_to_smem %s11, 16, [#allocation3], [#allocation2]
  %14 = dma.done [#allocation2], 16
  %15 = sfence
  $region1: #{transposable_genes_forward_batched.1} parent=0
    #allocation4 [shape = 'u8[524288]{0}', space=vmem, size = 0x80000, scoped, tag = 'input window, operand 3']
    #allocation5 [shape = 's32[2]{0}', space=sflag, size = 0x8, scoped, tag = 'scoped memory for transposable_genes_forward_batched.1']
    #allocation6 [shape = 's32[2]{0}', space=sflag, size = 0x8, scoped, tag = 'scoped memory for transposable_genes_forward_batched.1']
    #allocation7 [shape = 'u8[1024]{0}', space=vmem, size = 0x400, scoped, tag = 'output window, operand 0']
    %16 = vsyncpa [#allocation5], 0
    %s17 = scalar_lea.sflag [#allocation5], 1
    %18 = vsyncpa %s17, 0
    %19 = vsyncpa [#allocation6], 0
    %s20 = scalar_lea.sflag [#allocation6], 1
    %21 = vsyncpa %s20, 0
    loop: start=0, step=1, limit=6
    $region2: #{transposable_genes_forward_batched.1} parent=1 // loop_pre_header
      _
    $region3: #{transposable_genes_forward_batched.1} parent=1 // loop_header
      %s23 = sphi 0, %s27
      %p24 = scmp.ge.s32.totalorder %s23, 6
      %s31 = sphi 0, %s31
      %s33 = sphi 0, %s31
      %s34 = sphi 0, %s33
      %s48 = sphi 0, %s34
      %s52 = sphi 0, %s52
      %s54 = sphi 0, %s52
      %s55 = sphi 0, %s54
      %s69 = sphi 0, %s55
      %s75 = sphi 0, %s77
      %s78 = sphi 0, %s75
      %s79 = sphi 0, %s78
      %s95 = sphi 0, %s79
      %s101 = sphi 0, %s103
      %s104 = sphi 0, %s101
      %s105 = sphi 0, %s104
      %s121 = sphi 0, %s105
      %s127 = sphi 0, %s129
      %s130 = sphi 0, %s127
      %s131 = sphi 0, %s130
      %s147 = sphi 0, %s131
    $region4: #{transposable_genes_forward_batched.1} parent=1 // loop_header_branch
      %26 = sbr.rel (%p24) target = $region8
    $region5: #{transposable_genes_forward_batched.1} parent=1 // loop_body
      %s28 = ssub.s32 %s23, 1
      %s29 = ssub.s32 %s23, 2
      %s30 = sadd.s32 %s23, 1
      %s32 = sadd.s32 %s31, 1
      %p35 = scmp.eq.s32.totalorder %s23, 3
      %p36 = scmp.ne.s32.totalorder %s31, %s33
      %p37 = scmp.eq.s32.totalorder %s23, 0
      %p38 = por %p36, %p37
      %p39 = scmp.ne.s32.totalorder %s31, %s33
      %p40 = scmp.eq.s32.totalorder %s28, 3
      %p41 = por %p39, %p40
      %p42 = scmp.ne.s32.totalorder %s33, %s34
      %p43 = scmp.eq.s32.totalorder %s28, 0
      %p44 = por %p42, %p43
      %p45 = scmp.ne.s32.totalorder %s33, %s34
      %p46 = scmp.eq.s32.totalorder %s29, 3
      %p47 = por %p45, %p46
      %p49 = scmp.ne.s32.totalorder %s34, %s48
      %p50 = scmp.eq.s32.totalorder %s29, 0
      %p51 = por %p49, %p50
      %s53 = sadd.s32 %s52, 1
      %p56 = scmp.eq.s32.totalorder %s23, 3
      %p57 = scmp.ne.s32.totalorder %s52, %s54
      %p58 = scmp.eq.s32.totalorder %s23, 0
      %p59 = por %p57, %p58
      %p60 = scmp.ne.s32.totalorder %s52, %s54
      %p61 = scmp.eq.s32.totalorder %s28, 3
      %p62 = por %p60, %p61
      %p63 = scmp.ne.s32.totalorder %s54, %s55
      %p64 = scmp.eq.s32.totalorder %s28, 0
      %p65 = por %p63, %p64
      %p66 = scmp.ne.s32.totalorder %s54, %s55
      %p67 = scmp.eq.s32.totalorder %s29, 3
      %p68 = por %p66, %p67
      %p70 = scmp.ne.s32.totalorder %s55, %s69
      %p71 = scmp.eq.s32.totalorder %s29, 0
      %p72 = por %p70, %p71
      %s73 = ssub.s32 %s23, %s30
      %p74 = scmp.eq.s32.totalorder %s73, 0
      %s76 = sadd.s32 %s75, 1
      %s77 = scalar_select %p74, %s75, %s76
      %p80 = pneg %p74
      %p81 = scmp.eq.s32.totalorder %s23, 3
      %p82 = por %p80, %p81
      %p83 = scmp.ne.s32.totalorder %s75, %s78
      %p84 = scmp.eq.s32.totalorder %s23, 0
      %p85 = por %p83, %p84
      %p86 = scmp.ne.s32.totalorder %s75, %s78
      %p87 = scmp.eq.s32.totalorder %s28, 3
      %p88 = por %p86, %p87
      %p89 = scmp.ne.s32.totalorder %s78, %s79
      %p90 = scmp.eq.s32.totalorder %s28, 0
      %p91 = por %p89, %p90
      %p92 = scmp.ne.s32.totalorder %s78, %s79
      %p93 = scmp.eq.s32.totalorder %s29, 3
      %p94 = por %p92, %p93
      %p96 = scmp.ne.s32.totalorder %s79, %s95
      %p97 = scmp.eq.s32.totalorder %s29, 0
      %p98 = por %p96, %p97
      %s99 = ssub.s32 %s23, %s30
      %p100 = scmp.eq.s32.totalorder %s99, 0
      %s102 = sadd.s32 %s101, 1
      %s103 = scalar_select %p100, %s101, %s102
      %p106 = pneg %p100
      %p107 = scmp.eq.s32.totalorder %s23, 3
      %p108 = por %p106, %p107
      %p109 = scmp.ne.s32.totalorder %s101, %s104
      %p110 = scmp.eq.s32.totalorder %s23, 0
      %p111 = por %p109, %p110
      %p112 = scmp.ne.s32.totalorder %s101, %s104
      %p113 = scmp.eq.s32.totalorder %s28, 3
      %p114 = por %p112, %p113
      %p115 = scmp.ne.s32.totalorder %s104, %s105
      %p116 = scmp.eq.s32.totalorder %s28, 0
      %p117 = por %p115, %p116
      %p118 = scmp.ne.s32.totalorder %s104, %s105
      %p119 = scmp.eq.s32.totalorder %s29, 3
      %p120 = por %p118, %p119
      %p122 = scmp.ne.s32.totalorder %s105, %s121
      %p123 = scmp.eq.s32.totalorder %s29, 0
      %p124 = por %p122, %p123
      %s125 = ssub.s32 %s23, %s30
      %p126 = scmp.eq.s32.totalorder %s125, 0
      %s128 = sadd.s32 %s127, 1
      %s129 = scalar_select %p126, %s127, %s128
      %p132 = pneg %p126
      %p133 = scmp.eq.s32.totalorder %s23, 3
      %p134 = por %p132, %p133
      %p135 = scmp.ne.s32.totalorder %s127, %s130
      %p136 = scmp.eq.s32.totalorder %s23, 0
      %p137 = por %p135, %p136
      %p138 = scmp.ne.s32.totalorder %s127, %s130
      %p139 = scmp.eq.s32.totalorder %s28, 3
      %p140 = por %p138, %p139
      %p141 = scmp.ne.s32.totalorder %s130, %s131
      %p142 = scmp.eq.s32.totalorder %s28, 0
      %p143 = por %p141, %p142
      %p144 = scmp.ne.s32.totalorder %s130, %s131
      %p145 = scmp.eq.s32.totalorder %s29, 3
      %p146 = por %p144, %p145
      %p148 = scmp.ne.s32.totalorder %s131, %s147
      %p149 = scmp.eq.s32.totalorder %s29, 0
      %p150 = por %p148, %p149
      %p151 = scmp.le.s32.totalorder 1, %s23
      %p152 = scmp.lt.s32.totalorder %s23, 5
      %p153 = pnand %p151, %p152
      %p154 = pneg %p153
      // Predicated region
      $region9: #{transposable_genes_forward_batched.1} parent=5 // pred_check
        _
      $region10: #{transposable_genes_forward_batched.1} parent=5 // pred_check_branch
        %156 = sbr.rel (%p153) target = $region12
      $region11: #{transposable_genes_forward_batched.1} parent=5 // pred_region
        %s157 = ssub.s32 %s23, 1
        // Predicated region
        $region13: #{transposable_genes_forward_batched.1} parent=11 // pred_check
          %p158 = pneg %p44
        $region14: #{transposable_genes_forward_batched.1} parent=11 // pred_check_branch
          %160 = sbr.rel (%p158) target = $region16
        $region15: #{transposable_genes_forward_batched.1} parent=11 // pred_region
          _
        $region16: #{transposable_genes_forward_batched.1} parent=11 // pred_fallthru
          _
        // Predicated region
        $region17: #{transposable_genes_forward_batched.1} parent=11 // pred_check
          %p161 = pneg %p65
        $region18: #{transposable_genes_forward_batched.1} parent=11 // pred_check_branch
          %163 = sbr.rel (%p161) target = $region20
        $region19: #{transposable_genes_forward_batched.1} parent=11 // pred_region
          _
        $region20: #{transposable_genes_forward_batched.1} parent=11 // pred_fallthru
          _
      $region12: #{transposable_genes_forward_batched.1} parent=5 // pred_fallthru
        _
      %p164 = scmp.lt.s32.totalorder %s23, 4
      // Predicated region
      $region21: #{transposable_genes_forward_batched.1} parent=5 // pred_check
        %p165 = pneg %p164
      $region22: #{transposable_genes_forward_batched.1} parent=5 // pred_check_branch
        %167 = sbr.rel (%p165) target = $region24
      $region23: #{transposable_genes_forward_batched.1} parent=5 // pred_region
        // Predicated region
        $region25: #{transposable_genes_forward_batched.1} parent=23 // pred_check
          %p168 = pneg %p85
        $region26: #{transposable_genes_forward_batched.1} parent=23 // pred_check_branch
          %170 = sbr.rel (%p168) target = $region28
        $region27: #{transposable_genes_forward_batched.1} parent=23 // pred_region
          %s171 = sand.u32 %s75, 1
          %s172 = scalar_lea.sflag [#allocation5], %s171
          %s173 = sand.u32 %s75, 1
          %s174 = smul.addr %s173, 512
          %s175 = scalar_lea.vmem [#allocation4], %s174
          %s177 = ssub.s32 8192, 8192
          %178 = vsyncadd %s172, %s177
          %s179 = smul.addr %s23, 64
          %s180 = smul.addr %s179, 128
          %s181 = scalar_lea.hbm %s3, %s180
          %s182 = sshll.u32 %s175, 4
          %s183 = int_to_ptr.vmem [resolvable:$true] %s182
          %188 = dma.hbm_to_vmem [thread:$0]  %s181, 8192, %s183, %s172, 128, 128, 8
        $region28: #{transposable_genes_forward_batched.1} parent=23 // pred_fallthru
          _
        // Predicated region
        $region29: #{transposable_genes_forward_batched.1} parent=23 // pred_check
          %p189 = pneg %p111
        $region30: #{transposable_genes_forward_batched.1} parent=23 // pred_check_branch
          %191 = sbr.rel (%p189) target = $region32
        $region31: #{transposable_genes_forward_batched.1} parent=23 // pred_region
          %p192 = scmp.lt.s32.totalorder %s23, 3
          %s193 = scalar_select %p192, %s23, 3
          %s194 = smul.addr %s193, 4
          %s195 = smul.addr %s194, 4
          %s196 = scalar_lea.vmem %s4, %s195
        $region32: #{transposable_genes_forward_batched.1} parent=23 // pred_fallthru
          _
      $region24: #{transposable_genes_forward_batched.1} parent=5 // pred_fallthru
        _
      %p197 = scmp.le.s32.totalorder 1, %s23
      %p198 = scmp.lt.s32.totalorder %s23, 5
      %p199 = pnand %p197, %p198
      %p200 = pneg %p199
      // Predicated region
      $region33: #{transposable_genes_forward_batched.1} parent=5 // pred_check
        _
      $region34: #{transposable_genes_forward_batched.1} parent=5 // pred_check_branch
        %202 = sbr.rel (%p199) target = $region36
      $region35: #{transposable_genes_forward_batched.1} parent=5 // pred_region
        %s203 = ssub.s32 %s23, 1
        %s204 = sand.u32 %s78, 1
        %s205 = scalar_lea.sflag [#allocation5], %s204
        %s206 = sand.u32 %s78, 1
        %s207 = smul.addr %s206, 512
        %s208 = scalar_lea.vmem [#allocation4], %s207
        // Predicated region
        $region37: #{transposable_genes_forward_batched.1} parent=35 // pred_check
          %p209 = pneg %p91
        $region38: #{transposable_genes_forward_batched.1} parent=35 // pred_check_branch
          %211 = sbr.rel (%p209) target = $region40
        $region39: #{transposable_genes_forward_batched.1} parent=35 // pred_region
          %212 = dma.done %s205, 8192
        $region40: #{transposable_genes_forward_batched.1} parent=35 // pred_fallthru
          _
        %p213 = pneg %p44
        %p214 = pneg %p41
        %p215 = pneg %p65
        %p216 = pneg %p62
        %s217 = sand.u32 %s78, 1
        %s218 = scalar_lea.sflag [#allocation5], %s217
        %s219 = sand.u32 %s78, 1
        %s220 = smul.addr %s219, 512
        %s221 = scalar_lea.vmem [#allocation4], %s220
        %p222 = pneg %p91
        %p223 = pneg %p88
        %p224 = scmp.lt.s32.totalorder %s28, 3
        %s225 = scalar_select %p224, %s28, 3
        %s226 = smul.addr %s225, 4
        %s227 = smul.addr %s226, 4
        %s228 = scalar_lea.vmem %s4, %s227
        %p229 = pneg %p117
        %p230 = pneg %p114
        %p231 = pneg %p143
        %p232 = pneg %p140
        %s233 = sand.u32 %s130, 1
        %s234 = scalar_lea.sflag [#allocation6], %s233
        %s235 = sand.u32 %s130, 1
        %s236 = scalar_lea.vmem [#allocation7], %s235
        %p237 = scmp.lt.s32.totalorder %s28, 3
        %s238 = scalar_select %p237, %s28, 3
        %s239 = smul.addr %s238, 4
        %s240 = smul.addr %s239, 4
        %s241 = scalar_lea.vmem %s4, %s240
        %v243 = vld [vmem:[%s2] sm:$0xff]
        %v244 = vld [vmem:[%s2 + $0x8] sm:$0xff]
        %v245 = vpack.c.bf16 %v244, %v243
        %v246 = vld [vmem:[%s1] sm:$0xff]
        %v247 = vld [vmem:[%s1 + $0x8] sm:$0xff]
        %v248 = vld [vmem:[%s208] sm:$0xff]
        %v249 = vld [vmem:[%s208 + $0x8] sm:$0xff]
        %v250 = vld [vmem:[%s208 + $0x10] sm:$0xff]
        %v251 = vld [vmem:[%s208 + $0x18] sm:$0xff]
        %v252 = vld [vmem:[%s208 + $0x20] sm:$0xff]
        %v253 = vld [vmem:[%s208 + $0x28] sm:$0xff]
        %v254 = vld [vmem:[%s208 + $0x30] sm:$0xff]
        %v255 = vld [vmem:[%s208 + $0x38] sm:$0xff]
        %v256 = vld [vmem:[%s208 + $0x40] sm:$0xff]
        %v257 = vld [vmem:[%s208 + $0x48] sm:$0xff]
        %v258 = vld [vmem:[%s208 + $0x50] sm:$0xff]
        %v259 = vld [vmem:[%s208 + $0x58] sm:$0xff]
        %v260 = vld [vmem:[%s208 + $0x60] sm:$0xff]
        %v261 = vld [vmem:[%s208 + $0x68] sm:$0xff]
        %v262 = vld [vmem:[%s208 + $0x70] sm:$0xff]
        %v263 = vld [vmem:[%s208 + $0x78] sm:$0xff]
        %v264 = vpack.c.bf16 %v249, %v248
        %v265 = vpack.c.bf16 %v251, %v250
        %v266 = vpack.c.bf16 %v253, %v252
        %v267 = vpack.c.bf16 %v255, %v254
        %v268 = vpack.c.bf16 %v257, %v256
        %v269 = vpack.c.bf16 %v259, %v258
        %v270 = vpack.c.bf16 %v261, %v260
        %v271 = vpack.c.bf16 %v263, %v262
        %v272 = vpack.c.bf16 %v247, %v246
        %273 = vmatprep.subr.bf16.mxu0 0
        %274 = vmatpush1.bf16.msra.mxu0 %v271
        %275 = vmatprep.subr.bf16.mxu0 0
        %276 = vmatpush1.bf16.msra.mxu0 %v270
        %277 = vmatprep.subr.bf16.mxu0 0
        %278 = vmatpush1.bf16.msra.mxu0 %v269
        %279 = vmatprep.subr.bf16.mxu0 0
        %280 = vmatpush1.bf16.msra.mxu0 %v268
        %281 = vmatprep.subr.bf16.mxu0 0
        %282 = vmatpush1.bf16.msra.mxu0 %v267
        %283 = vmatprep.subr.bf16.mxu0 0
        %284 = vmatpush1.bf16.msra.mxu0 %v266
        %285 = vmatprep.subr.bf16.mxu0 0
        %286 = vmatpush1.bf16.msra.mxu0 %v265
        %287 = vmatprep.subr.bf16.mxu0 0
        %288 = vmatpush1.bf16.msra.mxu0 %v264
        %289 = vmatprep.subr.bf16.mxu0 0
        %290 = vmatpush2.bf16.msra.mxu0 0
        %291 = vmatprep.subr.bf16.mxu0 0
        %292 = vmatpush2.bf16.msra.mxu0 0
        %293 = vmatprep.subr.bf16.mxu0 0
        %294 = vmatpush2.bf16.msra.mxu0 0
        %295 = vmatprep.subr.bf16.mxu0 0
        %296 = vmatpush2.bf16.msra.mxu0 0
        %297 = vmatprep.subr.bf16.mxu0 0
        %298 = vmatpush2.bf16.msra.mxu0 0
        %299 = vmatprep.subr.bf16.mxu0 0
        %300 = vmatpush2.bf16.msra.mxu0 0
        %301 = vmatprep.subr.bf16.mxu0 0
        %302 = vmatpush2.bf16.msra.mxu0 0
        %303 = vmatprep.subr.bf16.mxu0 0
        %304 = vmatpush2.bf16.msra.mxu0 0
        %305 = vmatprep.mubr.bf16.mxu0 0
        %306 = vmatmul.mubr.bf16.gmra.mxu0 %v272
        %v307 = vpop.f32.mrf.mxu0
        %v308 = vadd.f32 0.0, %v307
        %v309 = vpop.f32.mrf.mxu0
        %v310 = vpop.f32.mrf.mxu0
        %v311 = vadd.f32 0.0, %v310
        %v312 = vpop.f32.mrf.mxu0
        %313 = vdwg.mxu0
        %v314 = vpack.c.bf16 %v311, %v308
        %v315 = vld [vmem:[%s241] sm:$0x7]
        %v316 = vlaneseq
        %v317 = vshrl.u32 %v316, 7
        %v318 = vsub.s32 0, %v317
        %v319 = vrot.slane %v315, %v318
        %vm320 = vcmask 130048
        %v322 = vsel %vm320, %v245, 0
        %324 = vmatprep.subr.bf16.mxu0 0
        %325 = vmatpush1.bf16.msra.mxu0 0
        %326 = vmatprep.subr.bf16.mxu0 0
        %327 = vmatpush1.bf16.msra.mxu0 0
        %328 = vmatprep.subr.bf16.mxu0 0
        %329 = vmatpush1.bf16.msra.mxu0 0
        %330 = vmatprep.subr.bf16.mxu0 0
        %331 = vmatpush1.bf16.msra.mxu0 0
        %332 = vmatprep.subr.bf16.mxu0 0
        %333 = vmatpush1.bf16.msra.mxu0 0
        %334 = vmatprep.subr.bf16.mxu0 0
        %335 = vmatpush1.bf16.msra.mxu0 0
        %336 = vmatprep.subr.bf16.mxu0 0
        %337 = vmatpush1.bf16.msra.mxu0 0
        %338 = vmatprep.subr.bf16.mxu0 0
        %339 = vmatpush1.bf16.msra.mxu0 %v314
        %340 = vmatprep.subr.bf16.mxu0 0
        %341 = vmatpush2.bf16.msra.mxu0 0
        %342 = vmatprep.subr.bf16.mxu0 0
        %343 = vmatpush2.bf16.msra.mxu0 0
        %344 = vmatprep.subr.bf16.mxu0 0
        %345 = vmatpush2.bf16.msra.mxu0 0
        %346 = vmatprep.subr.bf16.mxu0 0
        %347 = vmatpush2.bf16.msra.mxu0 0
        %348 = vmatprep.subr.bf16.mxu0 0
        %349 = vmatpush2.bf16.msra.mxu0 0
        %350 = vmatprep.subr.bf16.mxu0 0
        %351 = vmatpush2.bf16.msra.mxu0 0
        %352 = vmatprep.subr.bf16.mxu0 0
        %353 = vmatpush2.bf16.msra.mxu0 0
        %354 = vmatprep.subr.bf16.mxu0 0
        %355 = vmatpush2.bf16.msra.mxu0 0
        %356 = vmatprep.mubr.bf16.mxu0 0
        %357 = vmatmul.mubr.bf16.gmra.mxu0 %v322
        %v358 = vpop.f32.mrf.mxu0
        %v359 = vadd.f32 %v319, %v358
        %v360 = vpop.f32.mrf.mxu0
        %v361 = vpop.f32.mrf.mxu0
        %v362 = vadd.f32 %v319, %v361
        %v363 = vpop.f32.mrf.mxu0
        %364 = vdwg.mxu0
        %365 = vadd.xlane.f32.xlu0 %v359
        %v366 = vpop.xlane.xlu0 %365
        %367 = vadd.xlane.f32.xlu0 %v362
        %v368 = vpop.xlane.xlu0 %367
        %v369 = vrcp.pop 128.0
        %v370 = vmul.f32 %v366, %v369
        %v371 = vmul.f32 %v368, %v369
        %v372 = vmul.f32 %v359, %v359
        %v373 = vmul.f32 %v362, %v362
        %374 = vadd.xlane.f32.xlu0 %v372
        %v375 = vpop.xlane.xlu0 %374
        %376 = vadd.xlane.f32.xlu0 %v373
        %v377 = vpop.xlane.xlu0 %376
        %v378 = vmul.f32 %v375, %v369
        %v379 = vmul.f32 %v377, %v369
        %v380 = vmul.f32 %v370, %v370
        %v381 = vmul.f32 %v371, %v371
        %v382 = vsub.f32 %v378, %v380
        %v383 = vsub.f32 %v379, %v381
        %v384 = vmax.f32 %v382, 0.0
        %v385 = vmax.f32 %v383, 0.0
        %v386 = vsub.f32 %v359, %v370
        %v387 = vsub.f32 %v362, %v371
        %v388 = vadd.f32 %v384, 1e-05
        %v389 = vadd.f32 %v385, 1e-05
        %v390 = vrsqrt.pop %v388
        %v391 = vrsqrt.pop %v389
        %v392 = vmul.f32 %v386, %v390
        %v393 = vmul.f32 %v387, %v391
        %v394 = vlaneseq
        %v395 = vshrl.u32 %v394, 7
        %v396 = vsub.s32 1, %v395
        %v397 = vrot.slane %v315, %v396
        %v398 = vmul.f32 %v392, %v397
        %v399 = vmul.f32 %v393, %v397
        %v400 = vlaneseq
        %v401 = vshrl.u32 %v400, 7
        %v402 = vsub.s32 2, %v401
        %v403 = vrot.slane %v315, %v402
        %v404 = vadd.f32 %v398, %v403
        %v405 = vadd.f32 %v399, %v403
        %v406 = vmax.f32 %v404, 0.0
        %v407 = vmax.f32 %v405, 0.0
        %s408 = scalar_lea.vmem %s208, 128 [#allocation4]
        %v409 = vld [vmem:[%s408] sm:$0xff]
        %v410 = vld [vmem:[%s408 + $0x8] sm:$0xff]
        %v411 = vld [vmem:[%s408 + $0x10] sm:$0xff]
        %v412 = vld [vmem:[%s408 + $0x18] sm:$0xff]
        %v413 = vld [vmem:[%s408 + $0x20] sm:$0xff]
        %v414 = vld [vmem:[%s408 + $0x28] sm:$0xff]
        %v415 = vld [vmem:[%s408 + $0x30] sm:$0xff]
        %v416 = vld [vmem:[%s408 + $0x38] sm:$0xff]
        %v417 = vld [vmem:[%s408 + $0x40] sm:$0xff]
        %v418 = vld [vmem:[%s408 + $0x48] sm:$0xff]
        %v419 = vld [vmem:[%s408 + $0x50] sm:$0xff]
        %v420 = vld [vmem:[%s408 + $0x58] sm:$0xff]
        %v421 = vld [vmem:[%s408 + $0x60] sm:$0xff]
        %v422 = vld [vmem:[%s408 + $0x68] sm:$0xff]
        %v423 = vld [vmem:[%s408 + $0x70] sm:$0xff]
        %v424 = vld [vmem:[%s408 + $0x78] sm:$0xff]
        %v425 = vpack.c.bf16 %v410, %v409
        %v426 = vpack.c.bf16 %v412, %v411
        %v427 = vpack.c.bf16 %v414, %v413
        %v428 = vpack.c.bf16 %v416, %v415
        %v429 = vpack.c.bf16 %v418, %v417
        %v430 = vpack.c.bf16 %v420, %v419
        %v431 = vpack.c.bf16 %v422, %v421
        %v432 = vpack.c.bf16 %v424, %v423
        %v433 = vpack.c.bf16 %v407, %v406
        %434 = vmatprep.subr.bf16.mxu0 0
        %435 = vmatpush1.bf16.msra.mxu0 %v432
        %436 = vmatprep.subr.bf16.mxu0 0
        %437 = vmatpush1.bf16.msra.mxu0 %v431
        %438 = vmatprep.subr.bf16.mxu0 0
        %439 = vmatpush1.bf16.msra.mxu0 %v430
        %440 = vmatprep.subr.bf16.mxu0 0
        %441 = vmatpush1.bf16.msra.mxu0 %v429
        %442 = vmatprep.subr.bf16.mxu0 0
        %443 = vmatpush1.bf16.msra.mxu0 %v428
        %444 = vmatprep.subr.bf16.mxu0 0
        %445 = vmatpush1.bf16.msra.mxu0 %v427
        %446 = vmatprep.subr.bf16.mxu0 0
        %447 = vmatpush1.bf16.msra.mxu0 %v426
        %448 = vmatprep.subr.bf16.mxu0 0
        %449 = vmatpush1.bf16.msra.mxu0 %v425
        %450 = vmatprep.subr.bf16.mxu0 0
        %451 = vmatpush2.bf16.msra.mxu0 0
        %452 = vmatprep.subr.bf16.mxu0 0
        %453 = vmatpush2.bf16.msra.mxu0 0
        %454 = vmatprep.subr.bf16.mxu0 0
        %455 = vmatpush2.bf16.msra.mxu0 0
        %456 = vmatprep.subr.bf16.mxu0 0
        %457 = vmatpush2.bf16.msra.mxu0 0
        %458 = vmatprep.subr.bf16.mxu0 0
        %459 = vmatpush2.bf16.msra.mxu0 0
        %460 = vmatprep.subr.bf16.mxu0 0
        %461 = vmatpush2.bf16.msra.mxu0 0
        %462 = vmatprep.subr.bf16.mxu0 0
        %463 = vmatpush2.bf16.msra.mxu0 0
        %464 = vmatprep.subr.bf16.mxu0 0
        %465 = vmatpush2.bf16.msra.mxu0 0
        %466 = vmatprep.mubr.bf16.mxu0 0
        %467 = vmatmul.mubr.bf16.gmra.mxu0 %v433
        %v468 = vpop.f32.mrf.mxu0
        %v469 = vadd.f32 0.0, %v468
        %v470 = vpop.f32.mrf.mxu0
        %v471 = vpop.f32.mrf.mxu0
        %v472 = vadd.f32 0.0, %v471
        %v473 = vpop.f32.mrf.mxu0
        %474 = vdwg.mxu0
        %v475 = vpack.c.bf16 %v472, %v469
        %s476 = scalar_lea.vmem %s241, 4
        %v477 = vld [vmem:[%s476] sm:$0x7]
        %v478 = vlaneseq
        %v479 = vshrl.u32 %v478, 7
        %v480 = vsub.s32 0, %v479
        %v481 = vrot.slane %v477, %v480
        %482 = vmatprep.subr.bf16.mxu0 0
        %483 = vmatpush1.bf16.msra.mxu0 0
        %484 = vmatprep.subr.bf16.mxu0 0
        %485 = vmatpush1.bf16.msra.mxu0 0
        %486 = vmatprep.subr.bf16.mxu0 0
        %487 = vmatpush1.bf16.msra.mxu0 0
        %488 = vmatprep.subr.bf16.mxu0 0
        %489 = vmatpush1.bf16.msra.mxu0 0
        %490 = vmatprep.subr.bf16.mxu0 0
        %491 = vmatpush1.bf16.msra.mxu0 0
        %492 = vmatprep.subr.bf16.mxu0 0
        %493 = vmatpush1.bf16.msra.mxu0 0
        %494 = vmatprep.subr.bf16.mxu0 0
        %495 = vmatpush1.bf16.msra.mxu0 0
        %496 = vmatprep.subr.bf16.mxu0 0
        %497 = vmatpush1.bf16.msra.mxu0 %v475
        %498 = vmatprep.subr.bf16.mxu0 0
        %499 = vmatpush2.bf16.msra.mxu0 0
        %500 = vmatprep.subr.bf16.mxu0 0
        %501 = vmatpush2.bf16.msra.mxu0 0
        %502 = vmatprep.subr.bf16.mxu0 0
        %503 = vmatpush2.bf16.msra.mxu0 0
        %504 = vmatprep.subr.bf16.mxu0 0
        %505 = vmatpush2.bf16.msra.mxu0 0
        %506 = vmatprep.subr.bf16.mxu0 0
        %507 = vmatpush2.bf16.msra.mxu0 0
        %508 = vmatprep.subr.bf16.mxu0 0
        %509 = vmatpush2.bf16.msra.mxu0 0
        %510 = vmatprep.subr.bf16.mxu0 0
        %511 = vmatpush2.bf16.msra.mxu0 0
        %512 = vmatprep.subr.bf16.mxu0 0
        %513 = vmatpush2.bf16.msra.mxu0 0
        %514 = vmatprep.mubr.bf16.mxu0 0
        %515 = vmatmul.mubr.bf16.gmra.mxu0 %v322
        %v516 = vpop.f32.mrf.mxu0
        %v517 = vadd.f32 %v481, %v516
        %v518 = vpop.f32.mrf.mxu0
        %v519 = vpop.f32.mrf.mxu0
        %v520 = vadd.f32 %v481, %v519
        %v521 = vpop.f32.mrf.mxu0
        %522 = vdwg.mxu0
        %523 = vadd.xlane.f32.xlu0 %v517
        %v524 = vpop.xlane.xlu0 %523
        %525 = vadd.xlane.f32.xlu0 %v520
        %v526 = vpop.xlane.xlu0 %525
        %v527 = vmul.f32 %v524, %v369
        %v528 = vmul.f32 %v526, %v369
        %v529 = vmul.f32 %v517, %v517
        %v530 = vmul.f32 %v520, %v520
        %531 = vadd.xlane.f32.xlu0 %v529
        %v532 = vpop.xlane.xlu0 %531
        %533 = vadd.xlane.f32.xlu0 %v530
        %v534 = vpop.xlane.xlu0 %533
        %v535 = vmul.f32 %v532, %v369
        %v536 = vmul.f32 %v534, %v369
        %v537 = vmul.f32 %v527, %v527
        %v538 = vmul.f32 %v528, %v528
        %v539 = vsub.f32 %v535, %v537
        %v540 = vsub.f32 %v536, %v538
        %v541 = vmax.f32 %v539, 0.0
        %v542 = vmax.f32 %v540, 0.0
        %v543 = vsub.f32 %v517, %v527
        %v544 = vsub.f32 %v520, %v528
        %v545 = vadd.f32 %v541, 1e-05
        %v546 = vadd.f32 %v542, 1e-05
        %v547 = vrsqrt.pop %v545
        %v548 = vrsqrt.pop %v546
        %v549 = vmul.f32 %v543, %v547
        %v550 = vmul.f32 %v544, %v548
        %v551 = vlaneseq
        %v552 = vshrl.u32 %v551, 7
        %v553 = vsub.s32 1, %v552
        %v554 = vrot.slane %v477, %v553
        %v555 = vmul.f32 %v549, %v554
        %v556 = vmul.f32 %v550, %v554
        %v557 = vlaneseq
        %v558 = vshrl.u32 %v557, 7
        %v559 = vsub.s32 2, %v558
        %v560 = vrot.slane %v477, %v559
        %v561 = vadd.f32 %v555, %v560
        %v562 = vadd.f32 %v556, %v560
        %v563 = vmax.f32 %v561, 0.0
        %v564 = vmax.f32 %v562, 0.0
        %s565 = scalar_lea.vmem %s208, 256 [#allocation4]
        %v566 = vld [vmem:[%s565] sm:$0xff]
        %v567 = vld [vmem:[%s565 + $0x8] sm:$0xff]
        %v568 = vld [vmem:[%s565 + $0x10] sm:$0xff]
        %v569 = vld [vmem:[%s565 + $0x18] sm:$0xff]
        %v570 = vld [vmem:[%s565 + $0x20] sm:$0xff]
        %v571 = vld [vmem:[%s565 + $0x28] sm:$0xff]
        %v572 = vld [vmem:[%s565 + $0x30] sm:$0xff]
        %v573 = vld [vmem:[%s565 + $0x38] sm:$0xff]
        %v574 = vld [vmem:[%s565 + $0x40] sm:$0xff]
        %v575 = vld [vmem:[%s565 + $0x48] sm:$0xff]
        %v576 = vld [vmem:[%s565 + $0x50] sm:$0xff]
        %v577 = vld [vmem:[%s565 + $0x58] sm:$0xff]
        %v578 = vld [vmem:[%s565 + $0x60] sm:$0xff]
        %v579 = vld [vmem:[%s565 + $0x68] sm:$0xff]
        %v580 = vld [vmem:[%s565 + $0x70] sm:$0xff]
        %v581 = vld [vmem:[%s565 + $0x78] sm:$0xff]
        %v582 = vpack.c.bf16 %v567, %v566
        %v583 = vpack.c.bf16 %v569, %v568
        %v584 = vpack.c.bf16 %v571, %v570
        %v585 = vpack.c.bf16 %v573, %v572
        %v586 = vpack.c.bf16 %v575, %v574
        %v587 = vpack.c.bf16 %v577, %v576
        %v588 = vpack.c.bf16 %v579, %v578
        %v589 = vpack.c.bf16 %v581, %v580
        %v590 = vpack.c.bf16 %v564, %v563
        %591 = vmatprep.subr.bf16.mxu0 0
        %592 = vmatpush1.bf16.msra.mxu0 %v589
        %593 = vmatprep.subr.bf16.mxu0 0
        %594 = vmatpush1.bf16.msra.mxu0 %v588
        %595 = vmatprep.subr.bf16.mxu0 0
        %596 = vmatpush1.bf16.msra.mxu0 %v587
        %597 = vmatprep.subr.bf16.mxu0 0
        %598 = vmatpush1.bf16.msra.mxu0 %v586
        %599 = vmatprep.subr.bf16.mxu0 0
        %600 = vmatpush1.bf16.msra.mxu0 %v585
        %601 = vmatprep.subr.bf16.mxu0 0
        %602 = vmatpush1.bf16.msra.mxu0 %v584
        %603 = vmatprep.subr.bf16.mxu0 0
        %604 = vmatpush1.bf16.msra.mxu0 %v583
        %605 = vmatprep.subr.bf16.mxu0 0
        %606 = vmatpush1.bf16.msra.mxu0 %v582
        %607 = vmatprep.subr.bf16.mxu0 0
        %608 = vmatpush2.bf16.msra.mxu0 0
        %609 = vmatprep.subr.bf16.mxu0 0
        %610 = vmatpush2.bf16.msra.mxu0 0
        %611 = vmatprep.subr.bf16.mxu0 0
        %612 = vmatpush2.bf16.msra.mxu0 0
        %613 = vmatprep.subr.bf16.mxu0 0
        %614 = vmatpush2.bf16.msra.mxu0 0
        %615 = vmatprep.subr.bf16.mxu0 0
        %616 = vmatpush2.bf16.msra.mxu0 0
        %617 = vmatprep.subr.bf16.mxu0 0
        %618 = vmatpush2.bf16.msra.mxu0 0
        %619 = vmatprep.subr.bf16.mxu0 0
        %620 = vmatpush2.bf16.msra.mxu0 0
        %621 = vmatprep.subr.bf16.mxu0 0
        %622 = vmatpush2.bf16.msra.mxu0 0
        %623 = vmatprep.mubr.bf16.mxu0 0
        %624 = vmatmul.mubr.bf16.gmra.mxu0 %v590
        %v625 = vpop.f32.mrf.mxu0
        %v626 = vadd.f32 0.0, %v625
        %v627 = vpop.f32.mrf.mxu0
        %v628 = vpop.f32.mrf.mxu0
        %v629 = vadd.f32 0.0, %v628
        %v630 = vpop.f32.mrf.mxu0
        %631 = vdwg.mxu0
        %v632 = vpack.c.bf16 %v629, %v626
        %s633 = scalar_lea.vmem %s241, 8
        %v634 = vld [vmem:[%s633] sm:$0x7]
        %v635 = vlaneseq
        %v636 = vshrl.u32 %v635, 7
        %v637 = vsub.s32 0, %v636
        %v638 = vrot.slane %v634, %v637
        %639 = vmatprep.subr.bf16.mxu0 0
        %640 = vmatpush1.bf16.msra.mxu0 0
        %641 = vmatprep.subr.bf16.mxu0 0
        %642 = vmatpush1.bf16.msra.mxu0 0
        %643 = vmatprep.subr.bf16.mxu0 0
        %644 = vmatpush1.bf16.msra.mxu0 0
        %645 = vmatprep.subr.bf16.mxu0 0
        %646 = vmatpush1.bf16.msra.mxu0 0
        %647 = vmatprep.subr.bf16.mxu0 0
        %648 = vmatpush1.bf16.msra.mxu0 0
        %649 = vmatprep.subr.bf16.mxu0 0
        %650 = vmatpush1.bf16.msra.mxu0 0
        %651 = vmatprep.subr.bf16.mxu0 0
        %652 = vmatpush1.bf16.msra.mxu0 0
        %653 = vmatprep.subr.bf16.mxu0 0
        %654 = vmatpush1.bf16.msra.mxu0 %v632
        %655 = vmatprep.subr.bf16.mxu0 0
        %656 = vmatpush2.bf16.msra.mxu0 0
        %657 = vmatprep.subr.bf16.mxu0 0
        %658 = vmatpush2.bf16.msra.mxu0 0
        %659 = vmatprep.subr.bf16.mxu0 0
        %660 = vmatpush2.bf16.msra.mxu0 0
        %661 = vmatprep.subr.bf16.mxu0 0
        %662 = vmatpush2.bf16.msra.mxu0 0
        %663 = vmatprep.subr.bf16.mxu0 0
        %664 = vmatpush2.bf16.msra.mxu0 0
        %665 = vmatprep.subr.bf16.mxu0 0
        %666 = vmatpush2.bf16.msra.mxu0 0
        %667 = vmatprep.subr.bf16.mxu0 0
        %668 = vmatpush2.bf16.msra.mxu0 0
        %669 = vmatprep.subr.bf16.mxu0 0
        %670 = vmatpush2.bf16.msra.mxu0 0
        %671 = vmatprep.mubr.bf16.mxu0 0
        %672 = vmatmul.mubr.bf16.gmra.mxu0 %v322
        %v673 = vpop.f32.mrf.mxu0
        %v674 = vadd.f32 %v638, %v673
        %v675 = vpop.f32.mrf.mxu0
        %v676 = vpop.f32.mrf.mxu0
        %v677 = vadd.f32 %v638, %v676
        %v678 = vpop.f32.mrf.mxu0
        %679 = vdwg.mxu0
        %680 = vadd.xlane.f32.xlu0 %v674
        %v681 = vpop.xlane.xlu0 %680
        %682 = vadd.xlane.f32.xlu0 %v677
        %v683 = vpop.xlane.xlu0 %682
        %v684 = vmul.f32 %v681, %v369
        %v685 = vmul.f32 %v683, %v369
        %v686 = vmul.f32 %v674, %v674
        %v687 = vmul.f32 %v677, %v677
        %688 = vadd.xlane.f32.xlu0 %v686
        %v689 = vpop.xlane.xlu0 %688
        %690 = vadd.xlane.f32.xlu0 %v687
        %v691 = vpop.xlane.xlu0 %690
        %v692 = vmul.f32 %v689, %v369
        %v693 = vmul.f32 %v691, %v369
        %v694 = vmul.f32 %v684, %v684
        %v695 = vmul.f32 %v685, %v685
        %v696 = vsub.f32 %v692, %v694
        %v697 = vsub.f32 %v693, %v695
        %v698 = vmax.f32 %v696, 0.0
        %v699 = vmax.f32 %v697, 0.0
        %v700 = vsub.f32 %v674, %v684
        %v701 = vsub.f32 %v677, %v685
        %v702 = vadd.f32 %v698, 1e-05
        %v703 = vadd.f32 %v699, 1e-05
        %v704 = vrsqrt.pop %v702
        %v705 = vrsqrt.pop %v703
        %v706 = vmul.f32 %v700, %v704
        %v707 = vmul.f32 %v701, %v705
        %v708 = vlaneseq
        %v709 = vshrl.u32 %v708, 7
        %v710 = vsub.s32 1, %v709
        %v711 = vrot.slane %v634, %v710
        %v712 = vmul.f32 %v706, %v711
        %v713 = vmul.f32 %v707, %v711
        %v714 = vlaneseq
        %v715 = vshrl.u32 %v714, 7
        %v716 = vsub.s32 2, %v715
        %v717 = vrot.slane %v634, %v716
        %v718 = vadd.f32 %v712, %v717
        %v719 = vadd.f32 %v713, %v717
        %v720 = vmax.f32 %v718, 0.0
        %v721 = vmax.f32 %v719, 0.0
        %s722 = scalar_lea.vmem %s208, 384 [#allocation4]
        %v723 = vld [vmem:[%s722] sm:$0xff]
        %v724 = vld [vmem:[%s722 + $0x8] sm:$0xff]
        %v725 = vld [vmem:[%s722 + $0x10] sm:$0xff]
        %v726 = vld [vmem:[%s722 + $0x18] sm:$0xff]
        %v727 = vld [vmem:[%s722 + $0x20] sm:$0xff]
        %v728 = vld [vmem:[%s722 + $0x28] sm:$0xff]
        %v729 = vld [vmem:[%s722 + $0x30] sm:$0xff]
        %v730 = vld [vmem:[%s722 + $0x38] sm:$0xff]
        %v731 = vld [vmem:[%s722 + $0x40] sm:$0xff]
        %v732 = vld [vmem:[%s722 + $0x48] sm:$0xff]
        %v733 = vld [vmem:[%s722 + $0x50] sm:$0xff]
        %v734 = vld [vmem:[%s722 + $0x58] sm:$0xff]
        %v735 = vld [vmem:[%s722 + $0x60] sm:$0xff]
        %v736 = vld [vmem:[%s722 + $0x68] sm:$0xff]
        %v737 = vld [vmem:[%s722 + $0x70] sm:$0xff]
        %v738 = vld [vmem:[%s722 + $0x78] sm:$0xff]
        %v739 = vpack.c.bf16 %v724, %v723
        %v740 = vpack.c.bf16 %v726, %v725
        %v741 = vpack.c.bf16 %v728, %v727
        %v742 = vpack.c.bf16 %v730, %v729
        %v743 = vpack.c.bf16 %v732, %v731
        %v744 = vpack.c.bf16 %v734, %v733
        %v745 = vpack.c.bf16 %v736, %v735
        %v746 = vpack.c.bf16 %v738, %v737
        %v747 = vpack.c.bf16 %v721, %v720
        %748 = vmatprep.subr.bf16.mxu0 0
        %749 = vmatpush1.bf16.msra.mxu0 %v746
        %750 = vmatprep.subr.bf16.mxu0 0
        %751 = vmatpush1.bf16.msra.mxu0 %v745
        %752 = vmatprep.subr.bf16.mxu0 0
        %753 = vmatpush1.bf16.msra.mxu0 %v744
        %754 = vmatprep.subr.bf16.mxu0 0
        %755 = vmatpush1.bf16.msra.mxu0 %v743
        %756 = vmatprep.subr.bf16.mxu0 0
        %757 = vmatpush1.bf16.msra.mxu0 %v742
        %758 = vmatprep.subr.bf16.mxu0 0
        %759 = vmatpush1.bf16.msra.mxu0 %v741
        %760 = vmatprep.subr.bf16.mxu0 0
        %761 = vmatpush1.bf16.msra.mxu0 %v740
        %762 = vmatprep.subr.bf16.mxu0 0
        %763 = vmatpush1.bf16.msra.mxu0 %v739
        %764 = vmatprep.subr.bf16.mxu0 0
        %765 = vmatpush2.bf16.msra.mxu0 0
        %766 = vmatprep.subr.bf16.mxu0 0
        %767 = vmatpush2.bf16.msra.mxu0 0
        %768 = vmatprep.subr.bf16.mxu0 0
        %769 = vmatpush2.bf16.msra.mxu0 0
        %770 = vmatprep.subr.bf16.mxu0 0
        %771 = vmatpush2.bf16.msra.mxu0 0
        %772 = vmatprep.subr.bf16.mxu0 0
        %773 = vmatpush2.bf16.msra.mxu0 0
        %774 = vmatprep.subr.bf16.mxu0 0
        %775 = vmatpush2.bf16.msra.mxu0 0
        %776 = vmatprep.subr.bf16.mxu0 0
        %777 = vmatpush2.bf16.msra.mxu0 0
        %778 = vmatprep.subr.bf16.mxu0 0
        %779 = vmatpush2.bf16.msra.mxu0 0
        %780 = vmatprep.mubr.bf16.mxu0 0
        %781 = vmatmul.mubr.bf16.gmra.mxu0 %v747
        %v782 = vpop.f32.mrf.mxu0
        %v783 = vadd.f32 0.0, %v782
        %v784 = vpop.f32.mrf.mxu0
        %v785 = vpop.f32.mrf.mxu0
        %v786 = vadd.f32 0.0, %v785
        %v787 = vpop.f32.mrf.mxu0
        %788 = vdwg.mxu0
        %v789 = vpack.c.bf16 %v786, %v783
        %s790 = scalar_lea.vmem %s241, 12
        %v791 = vld [vmem:[%s790] sm:$0x7]
        %v792 = vlaneseq
        %v793 = vshrl.u32 %v792, 7
        %v794 = vsub.s32 0, %v793
        %v795 = vrot.slane %v791, %v794
        %796 = vmatprep.subr.bf16.mxu0 0
        %797 = vmatpush1.bf16.msra.mxu0 0
        %798 = vmatprep.subr.bf16.mxu0 0
        %799 = vmatpush1.bf16.msra.mxu0 0
        %800 = vmatprep.subr.bf16.mxu0 0
        %801 = vmatpush1.bf16.msra.mxu0 0
        %802 = vmatprep.subr.bf16.mxu0 0
        %803 = vmatpush1.bf16.msra.mxu0 0
        %804 = vmatprep.subr.bf16.mxu0 0
        %805 = vmatpush1.bf16.msra.mxu0 0
        %806 = vmatprep.subr.bf16.mxu0 0
        %807 = vmatpush1.bf16.msra.mxu0 0
        %808 = vmatprep.subr.bf16.mxu0 0
        %809 = vmatpush1.bf16.msra.mxu0 0
        %810 = vmatprep.subr.bf16.mxu0 0
        %811 = vmatpush1.bf16.msra.mxu0 %v789
        %812 = vmatprep.subr.bf16.mxu0 0
        %813 = vmatpush2.bf16.msra.mxu0 0
        %814 = vmatprep.subr.bf16.mxu0 0
        %815 = vmatpush2.bf16.msra.mxu0 0
        %816 = vmatprep.subr.bf16.mxu0 0
        %817 = vmatpush2.bf16.msra.mxu0 0
        %818 = vmatprep.subr.bf16.mxu0 0
        %819 = vmatpush2.bf16.msra.mxu0 0
        %820 = vmatprep.subr.bf16.mxu0 0
        %821 = vmatpush2.bf16.msra.mxu0 0
        %822 = vmatprep.subr.bf16.mxu0 0
        %823 = vmatpush2.bf16.msra.mxu0 0
        %824 = vmatprep.subr.bf16.mxu0 0
        %825 = vmatpush2.bf16.msra.mxu0 0
        %826 = vmatprep.subr.bf16.mxu0 0
        %827 = vmatpush2.bf16.msra.mxu0 0
        %828 = vmatprep.mubr.bf16.mxu0 0
        %829 = vmatmul.mubr.bf16.gmra.mxu0 %v322
        %v830 = vpop.f32.mrf.mxu0
        %v831 = vadd.f32 %v795, %v830
        %v832 = vpop.f32.mrf.mxu0
        %v833 = vpop.f32.mrf.mxu0
        %v834 = vadd.f32 %v795, %v833
        %v835 = vpop.f32.mrf.mxu0
        %836 = vdwg.mxu0
        %837 = vadd.xlane.f32.xlu0 %v831
        %v838 = vpop.xlane.xlu0 %837
        %839 = vadd.xlane.f32.xlu0 %v834
        %v840 = vpop.xlane.xlu0 %839
        %v841 = vmul.f32 %v838, %v369
        %v842 = vmul.f32 %v840, %v369
        %v843 = vmul.f32 %v831, %v831
        %v844 = vmul.f32 %v834, %v834
        %845 = vadd.xlane.f32.xlu0 %v843
        %v846 = vpop.xlane.xlu0 %845
        %847 = vadd.xlane.f32.xlu0 %v844
        %v848 = vpop.xlane.xlu0 %847
        %v849 = vmul.f32 %v846, %v369
        %v850 = vmul.f32 %v848, %v369
        %v851 = vmul.f32 %v841, %v841
        %v852 = vmul.f32 %v842, %v842
        %v853 = vsub.f32 %v849, %v851
        %v854 = vsub.f32 %v850, %v852
        %v855 = vmax.f32 %v853, 0.0
        %v856 = vmax.f32 %v854, 0.0
        %v857 = vsub.f32 %v831, %v841
        %v858 = vsub.f32 %v834, %v842
        %v859 = vadd.f32 %v855, 1e-05
        %v860 = vadd.f32 %v856, 1e-05
        %v861 = vrsqrt.pop %v859
        %v862 = vrsqrt.pop %v860
        %v863 = vmul.f32 %v857, %v861
        %v864 = vmul.f32 %v858, %v862
        %v865 = vlaneseq
        %v866 = vshrl.u32 %v865, 7
        %v867 = vsub.s32 1, %v866
        %v868 = vrot.slane %v791, %v867
        %v869 = vmul.f32 %v863, %v868
        %v870 = vmul.f32 %v864, %v868
        %v871 = vlaneseq
        %v872 = vshrl.u32 %v871, 7
        %v873 = vsub.s32 2, %v872
        %v874 = vrot.slane %v791, %v873
        %v875 = vadd.f32 %v869, %v874
        %v876 = vadd.f32 %v870, %v874
        %v877 = vmax.f32 %v875, 0.0
        %v878 = vmax.f32 %v876, 0.0
        %s879 = sld [smem:[#allocation3 + %s28]]
        %s880 = scvt.s32.f32 %s879
        %s881 = smul.f32 %s880, 0.0625
        %v882 = vadd.f32 %v877, %v878
        %v883 = vrot.slane %v882, 4
        %v884 = vadd.f32 %v882, %v883
        %v885 = vrot.slane %v884, 2
        %v886 = vadd.f32 %v884, %v885
        %v887 = vrot.slane %v886, 1
        %v888 = vadd.f32 %v886, %v887
        %v889 = vstv %s881
        %v890 = vmul.f32 %v888, %v889
        %891 = vst [vmem:[%s236] sm:$0x1] %v890
        %s892 = sand.u32 %s130, 1
        %s893 = scalar_lea.sflag [#allocation6], %s892
        %s894 = sand.u32 %s130, 1
        %s895 = scalar_lea.vmem [#allocation7], %s894
        // Predicated region
        $region41: #{transposable_genes_forward_batched.1} parent=35 // pred_check
          %p896 = pneg %p140
        $region42: #{transposable_genes_forward_batched.1} parent=35 // pred_check_branch
          %898 = sbr.rel (%p896) target = $region44
        $region43: #{transposable_genes_forward_batched.1} parent=35 // pred_region
          %s900 = ssub.s32 16, 16
          %901 = vsyncadd %s893, %s900
          %s902 = smul.addr %s28, 16
          %s903 = scalar_lea.hbm %s5, %s902
          %s905 = sshll.u32 %s895, 4
          %s906 = int_to_ptr.vmem [resolvable:$true] %s905
          %908 = dma.vmem_to_hbm [thread:$0]  %s906, 16, %s903, %s893
        $region44: #{transposable_genes_forward_batched.1} parent=35 // pred_fallthru
          _
      $region36: #{transposable_genes_forward_batched.1} parent=5 // pred_fallthru
        _
      %p909 = scmp.le.s32.totalorder 2, %s23
      // Predicated region
      $region45: #{transposable_genes_forward_batched.1} parent=5 // pred_check
        %p910 = pneg %p909
      $region46: #{transposable_genes_forward_batched.1} parent=5 // pred_check_branch
        %912 = sbr.rel (%p910) target = $region48
      $region47: #{transposable_genes_forward_batched.1} parent=5 // pred_region
        %s913 = ssub.s32 %s23, 2
        // Predicated region
        $region49: #{transposable_genes_forward_batched.1} parent=47 // pred_check
          %p914 = pneg %p146
        $region50: #{transposable_genes_forward_batched.1} parent=47 // pred_check_branch
          %916 = sbr.rel (%p914) target = $region52
        $region51: #{transposable_genes_forward_batched.1} parent=47 // pred_region
          %s917 = sand.u32 %s131, 1
          %s918 = scalar_lea.sflag [#allocation6], %s917
          %s919 = sand.u32 %s131, 1
          %s920 = scalar_lea.vmem [#allocation7], %s919
          %921 = dma.done %s918, 16
        $region52: #{transposable_genes_forward_batched.1} parent=47 // pred_fallthru
          _
      $region48: #{transposable_genes_forward_batched.1} parent=5 // pred_fallthru
        _
    $region6: #{transposable_genes_forward_batched.1} parent=1 // loop_footer
      %s27 = sadd.s32 1, %s23
    $region7: #{transposable_genes_forward_batched.1} parent=1 // loop_footer_branch
      %22 = sbr.rel target = $region3
    $region8: #{transposable_genes_forward_batched.1} parent=1 // loop_exit
      _
    %922 = vsyncpa [#allocation5], 1
    %s923 = scalar_lea.sflag [#allocation5], 1
    %924 = vsyncpa %s923, 1
    %925 = vsyncpa [#allocation6], 1
    %s926 = scalar_lea.sflag [#allocation6], 1
    %927 = vsyncpa %s926, 1

</llo_original>
